<compile_context>
chip_gen: v7x
topology: tpu7x:2x2x1
jax: 0.10.0
libtpu: 0.0.40
codegen_flags: <defaults>
</compile_context>

<pallas_src>
import jax
import jax.numpy as jnp
from jax.experimental import pallas as pl
from jax.experimental.pallas import tpu as pltpu


def _round_up(x, m):
    return ((x + m - 1) // m) * m


def _decoder_kernel(z_ref, u_ref, a_ref, o_ref):
    z = z_ref[...]                      # (tile_b, tile_d)
    u = u_ref[...]                      # (tile_b, tile_d)

    def row(i):
        # Static (1, tile_d) slice of the resident parameter block; broadcasts
        # against the (tile_b, tile_d) activation tile in the arithmetic below.
        return a_ref[i:i + 1, :]

    a1, a2, a3, a4, a5 = row(0), row(1), row(2), row(3), row(4)
    a6, a7, a8, a9, a10 = row(5), row(6), row(7), row(8), row(9)

    sig = jax.nn.sigmoid   # lax.logistic -> EUP slot; VALU stays free

    mu = a1 * sig(a2 * u + a3) + a4 * u + a5
    v = a6 * sig(a7 * u + a8) + a9 * u + a10
    o_ref[...] = (z - mu) * v + mu


def _chip_tuning():
    """Returns (target block bytes, vmem_limit_bytes or None, split_batch)."""
    try:
        kind = jax.devices()[0].device_kind.lower()
    except Exception:
        kind = ""
    if "v7" in kind:
        # 3 streamed arrays x 2 buffers x 6 MiB = 36 MiB < 48 MiB scoped limit
        # (physical VMEM is 64 MiB/TC).  2 TCs/chip -> keep >= 2 batch blocks.
        return 6 * 1024 * 1024, 48 * 1024 * 1024, True
    if "v6" in kind:
        # 3 x 2 x 4 MiB = 24 MiB fits the 32 MiB default scoped VMEM.
        return 4 * 1024 * 1024, None, False
    # v5e (16 MiB scoped default) and unknown chips: stay at 2 MiB blocks.
    return 2 * 1024 * 1024, None, False


def decoder_forward(z, u, a_params, *, tile_b=None, tile_d=None,
                    vmem_limit_bytes=None):
    """z, u: (B, D) float32. a_params: (10, D) float32 (a1..a10 stacked)."""
    B, D = z.shape
    assert u.shape == (B, D)
    assert a_params.shape == (10, D)

    target_bytes, auto_vmem, split_batch = _chip_tuning()
    if vmem_limit_bytes is None:
        vmem_limit_bytes = auto_vmem

    d_lanes = _round_up(D, 128)          # lane-padded width of one f32 row
    bytes_per_row = d_lanes * 4

    # --- tile selection: prefer full-width rows; only tile D if even 8 full
    # rows exceed the per-block budget (essentially never for ladder nets). ---
    if tile_d is None:
        if 8 * bytes_per_row <= target_bytes:
            tile_d = D
        else:
            tile_d = max(128, (target_bytes // (8 * 4)) // 128 * 128)
    full_width = tile_d >= D
    if full_width:
        tile_d = D
    else:
        tile_d = _round_up(tile_d, 128)

    if tile_b is None:
        row_bytes = _round_up(tile_d, 128) * 4
        tile_b = max(8, (target_bytes // row_bytes) // 8 * 8)
    tile_b = _round_up(tile_b, 8)
    tile_b = min(tile_b, _round_up(B, 8))
    if split_batch and B > 8:
        # Keep >= 2 batch blocks so both v7x TensorCores get work.
        tile_b = min(tile_b, _round_up(pl.cdiv(B, 2), 8))

    nb = pl.cdiv(B, tile_b)

    cp_kwargs = {}
    if vmem_limit_bytes is not None:
        cp_kwargs["vmem_limit_bytes"] = vmem_limit_bytes

    if full_width:
        # 1-D grid over batch blocks; (10, D) parameter block is index-invariant
        # => DMA'd once, resident across the whole grid.  Ragged B handled by
        # Pallas edge-block masking (no jnp.pad copies of z/u).
        grid = (nb,)
        in_specs = [
            pl.BlockSpec((tile_b, D), lambda i: (i, 0)),      # z
            pl.BlockSpec((tile_b, D), lambda i: (i, 0)),      # u
            pl.BlockSpec((10, D), lambda i: (0, 0)),          # a1..a10 (resident)
        ]
        out_specs = pl.BlockSpec((tile_b, D), lambda i: (i, 0))
        dims = ("parallel",)
    else:
        # Feature axis outermost so the (10, tile_d) parameter block only
        # changes (and is only re-DMA'd) once per outer step.
        nd = pl.cdiv(D, tile_d)
        grid = (nd, nb)
        in_specs = [
            pl.BlockSpec((tile_b, tile_d), lambda j, i: (i, j)),   # z
            pl.BlockSpec((tile_b, tile_d), lambda j, i: (i, j)),   # u
            pl.BlockSpec((10, tile_d), lambda j, i: (0, j)),       # a1..a10
        ]
        out_specs = pl.BlockSpec((tile_b, tile_d), lambda j, i: (i, j))
        dims = ("parallel", "parallel")

    return pl.pallas_call(
        _decoder_kernel,
        out_shape=jax.ShapeDtypeStruct((B, D), z.dtype),
        grid_spec=pltpu.PrefetchScalarGridSpec(
            num_scalar_prefetch=0,
            grid=grid,
            in_specs=in_specs,
            out_specs=out_specs,
        ),
        compiler_params=pltpu.CompilerParams(
            dimension_semantics=dims, **cp_kwargs),
    )(z, u, a_params)


def reference_forward(z, u, a_params):
    a = [a_params[i:i + 1, :] for i in range(10)]
    sig = jax.nn.sigmoid
    mu = a[0] * sig(a[1] * u + a[2]) + a[3] * u + a[4]
    v = a[5] * sig(a[6] * u + a[7]) + a[8] * u + a[9]
    return (z - mu) * v + mu


if __name__ == "__main__":
    key = jax.random.PRNGKey(0)
    k_z, k_u, k_a = jax.random.split(key, 3)

    init_weights = 0.01

    # Small, module-consistent shapes: batch=8, tensor_size=128.
    B, D = 8, 128
    z = jax.random.normal(k_z, (B, D), dtype=jnp.float32)
    u = jax.random.normal(k_u, (B, D), dtype=jnp.float32)
    a_params = jax.random.normal(k_a, (10, D), dtype=jnp.float32) * init_weights

    out = jax.block_until_ready(decoder_forward(z, u, a_params))
    ref = reference_forward(z, u, a_params)
    assert out.shape == (B, D)
    assert jnp.allclose(out, ref, atol=1e-5, rtol=1e-5)

    # Ragged shapes (B, D not multiples of 8/128): exercised via the cdiv grid
    # + Pallas edge-block masking, with no wrapper-side padding copies.
    B2, D2 = 36, 200
    z2 = jax.random.normal(k_z, (B2, D2), dtype=jnp.float32)
    u2 = jax.random.normal(k_u, (B2, D2), dtype=jnp.float32)
    a2 = jax.random.normal(k_a, (10, D2), dtype=jnp.float32) * init_weights

    out2 = jax.block_until_ready(decoder_forward(z2, u2, a2))
    ref2 = reference_forward(z2, u2, a2)
    assert out2.shape == (B2, D2)
    assert jnp.allclose(out2, ref2, atol=1e-5, rtol=1e-5)

    # Force the D-tiled (2-D grid, feature-axis-outermost) code path too.
    out3 = jax.block_until_ready(
        decoder_forward(z2, u2, a2, tile_b=16, tile_d=128))
    assert out3.shape == (B2, D2)
    assert jnp.allclose(out3, ref2, atol=1e-5, rtol=1e-5)

    print("KERNEL_OK")
</pallas_src>

<mosaic_0001>
module attributes {stable_mosaic.version = 11 : i64} {
  func.func @_decoder_kernel(%arg0: i32, %arg1: memref<8x128xf32, #tpu.memory_space<vmem>>, %arg2: memref<8x128xf32, #tpu.memory_space<vmem>>, %arg3: memref<10x128xf32, #tpu.memory_space<vmem>>, %arg4: memref<8x128xf32, #tpu.memory_space<vmem>>) attributes {dimension_semantics = [#tpu.dimension_semantics<parallel>], iteration_bounds = array<i64: 1>, scalar_prefetch = 0 : i64, scratch_operands = 0 : i64, tpu.core_type = #tpu.core_type<tc>, window_params = [{transform_indices = @transform_0, window_bounds = array<i64: 8, 128>}, {transform_indices = @transform_1, window_bounds = array<i64: 8, 128>}, {pipeline_mode = #tpu.pipeline_mode<synchronous>, transform_indices = @transform_2, window_bounds = array<i64: 10, 128>}, {transform_indices = @transform_3, window_bounds = array<i64: 8, 128>}]} {
    %c0 = arith.constant 0 : index
    %c0_0 = arith.constant 0 : index
    %0 = vector.load %arg1[%c0, %c0_0] : memref<8x128xf32, #tpu.memory_space<vmem>>, vector<8x128xf32>
    %c0_1 = arith.constant 0 : index
    %c0_2 = arith.constant 0 : index
    %1 = vector.load %arg2[%c0_1, %c0_2] : memref<8x128xf32, #tpu.memory_space<vmem>>, vector<8x128xf32>
    %c0_3 = arith.constant 0 : index
    %c0_4 = arith.constant 0 : index
    %2 = vector.load %arg3[%c0_3, %c0_4] : memref<10x128xf32, #tpu.memory_space<vmem>>, vector<1x128xf32>
    %c1 = arith.constant 1 : index
    %c0_5 = arith.constant 0 : index
    %3 = vector.load %arg3[%c1, %c0_5] : memref<10x128xf32, #tpu.memory_space<vmem>>, vector<1x128xf32>
    %c2 = arith.constant 2 : index
    %c0_6 = arith.constant 0 : index
    %4 = vector.load %arg3[%c2, %c0_6] : memref<10x128xf32, #tpu.memory_space<vmem>>, vector<1x128xf32>
    %c3 = arith.constant 3 : index
    %c0_7 = arith.constant 0 : index
    %5 = vector.load %arg3[%c3, %c0_7] : memref<10x128xf32, #tpu.memory_space<vmem>>, vector<1x128xf32>
    %c4 = arith.constant 4 : index
    %c0_8 = arith.constant 0 : index
    %6 = vector.load %arg3[%c4, %c0_8] : memref<10x128xf32, #tpu.memory_space<vmem>>, vector<1x128xf32>
    %c5 = arith.constant 5 : index
    %c0_9 = arith.constant 0 : index
    %7 = vector.load %arg3[%c5, %c0_9] : memref<10x128xf32, #tpu.memory_space<vmem>>, vector<1x128xf32>
    %c6 = arith.constant 6 : index
    %c0_10 = arith.constant 0 : index
    %8 = vector.load %arg3[%c6, %c0_10] : memref<10x128xf32, #tpu.memory_space<vmem>>, vector<1x128xf32>
    %c7 = arith.constant 7 : index
    %c0_11 = arith.constant 0 : index
    %9 = vector.load %arg3[%c7, %c0_11] : memref<10x128xf32, #tpu.memory_space<vmem>>, vector<1x128xf32>
    %c8 = arith.constant 8 : index
    %c0_12 = arith.constant 0 : index
    %10 = vector.load %arg3[%c8, %c0_12] : memref<10x128xf32, #tpu.memory_space<vmem>>, vector<1x128xf32>
    %c9 = arith.constant 9 : index
    %c0_13 = arith.constant 0 : index
    %11 = vector.load %arg3[%c9, %c0_13] : memref<10x128xf32, #tpu.memory_space<vmem>>, vector<1x128xf32>
    %12 = vector.broadcast %3 : vector<1x128xf32> to vector<8x128xf32>
    %13 = arith.mulf %12, %1 : vector<8x128xf32>
    %14 = vector.broadcast %4 : vector<1x128xf32> to vector<8x128xf32>
    %15 = arith.addf %13, %14 : vector<8x128xf32>
    %16 = arith.negf %15 : vector<8x128xf32>
    %17 = math.exp %16 : vector<8x128xf32>
    %cst = arith.constant 1.000000e+00 : f32
    %18 = vector.broadcast %cst : f32 to vector<8x128xf32>
    %19 = arith.addf %18, %17 : vector<8x128xf32>
    %20 = arith.divf %18, %19 : vector<8x128xf32>
    %21 = vector.broadcast %2 : vector<1x128xf32> to vector<8x128xf32>
    %22 = arith.mulf %21, %20 : vector<8x128xf32>
    %23 = vector.broadcast %5 : vector<1x128xf32> to vector<8x128xf32>
    %24 = arith.mulf %23, %1 : vector<8x128xf32>
    %25 = arith.addf %22, %24 : vector<8x128xf32>
    %26 = vector.broadcast %6 : vector<1x128xf32> to vector<8x128xf32>
    %27 = arith.addf %25, %26 : vector<8x128xf32>
    %28 = vector.broadcast %8 : vector<1x128xf32> to vector<8x128xf32>
    %29 = arith.mulf %28, %1 : vector<8x128xf32>
    %30 = vector.broadcast %9 : vector<1x128xf32> to vector<8x128xf32>
    %31 = arith.addf %29, %30 : vector<8x128xf32>
    %32 = arith.negf %31 : vector<8x128xf32>
    %33 = math.exp %32 : vector<8x128xf32>
    %cst_14 = arith.constant 1.000000e+00 : f32
    %34 = vector.broadcast %cst_14 : f32 to vector<8x128xf32>
    %35 = arith.addf %34, %33 : vector<8x128xf32>
    %36 = arith.divf %34, %35 : vector<8x128xf32>
    %37 = vector.broadcast %7 : vector<1x128xf32> to vector<8x128xf32>
    %38 = arith.mulf %37, %36 : vector<8x128xf32>
    %39 = vector.broadcast %10 : vector<1x128xf32> to vector<8x128xf32>
    %40 = arith.mulf %39, %1 : vector<8x128xf32>
    %41 = arith.addf %38, %40 : vector<8x128xf32>
    %42 = vector.broadcast %11 : vector<1x128xf32> to vector<8x128xf32>
    %43 = arith.addf %41, %42 : vector<8x128xf32>
    %44 = arith.subf %0, %27 : vector<8x128xf32>
    %45 = arith.mulf %44, %43 : vector<8x128xf32>
    %46 = arith.addf %45, %27 : vector<8x128xf32>
    %c0_15 = arith.constant 0 : index
    %c0_16 = arith.constant 0 : index
    %47 = vector.load %arg4[%c0_15, %c0_16] : memref<8x128xf32, #tpu.memory_space<vmem>>, vector<8x128xf32>
    tpu.vector_store %arg4[%c0_15, %c0_16], %46 {strides = array<i32>} : memref<8x128xf32, #tpu.memory_space<vmem>>, vector<8x128xf32>,
    return
  }
  func.func @transform_0(%arg0: i32) -> (i32, i32) {
    %c0_i32 = arith.constant 0 : i32
    %c0_i32_0 = arith.constant 0 : i32
    return %arg0, %c0_i32 : i32, i32
  }
  func.func @transform_1(%arg0: i32) -> (i32, i32) {
    %c0_i32 = arith.constant 0 : i32
    %c0_i32_0 = arith.constant 0 : i32
    return %arg0, %c0_i32 : i32, i32
  }
  func.func @transform_2(%arg0: i32) -> (i32, i32) {
    %c0_i32 = arith.constant 0 : i32
    %c0_i32_0 = arith.constant 0 : i32
    %c0_i32_1 = arith.constant 0 : i32
    return %c0_i32, %c0_i32_0 : i32, i32
  }
  func.func @transform_3(%arg0: i32) -> (i32, i32) {
    %c0_i32 = arith.constant 0 : i32
    %c0_i32_0 = arith.constant 0 : i32
    return %arg0, %c0_i32 : i32, i32
  }
}

</mosaic_0001>

<llo_original>
// kernel: tpu_custom_call.1
$region0: #{tpu_custom_call.1}
  #allocation0 [shape = 'u32[]', space=smem, size = 0x4, offset = 0x4, fixed_abs, tag = 'smem constant byte address 0x4 - core index']
  #allocation1 [shape = 'u32[144,128]{1,0:T(1,128)}', space=vmem, size = 0x12000, scoped, tag = 'internal scratch']
  %s0 = inlined_call_operand.hbm [shape: f32[8,128], index: 0, kind: input, shape index: {}]
  %s1 = inlined_call_operand.hbm [shape: f32[8,128], index: 1, kind: input, shape index: {}]
  %s2 = inlined_call_operand.hbm [shape: f32[10,128], index: 2, kind: input, shape index: {}]
  %s3 = inlined_call_operand.hbm [shape: f32[8,128], index: 3, kind: output, shape index: {}]
  %s4 = sld [smem:[#allocation0]]
  $region34: #{tpu_custom_call.1} parent=0
    _
  %s6 = ssub.s32 1, %s4
  %s7 = scalar_select 0, %s6, %s4
  $region1: #{tpu_custom_call.1} parent=0
    #allocation2 [shape = 'u8[4096]{0}', space=vmem, size = 0x1000, scoped, tag = 'input window, operand 0, single buffered']
    #allocation3 [shape = 's32[1]{0}', space=sflag, size = 0x4, scoped, tag = 'scoped memory for tpu_custom_call.1']
    #allocation4 [shape = 's32[1]{0}', space=sflag, size = 0x4, scoped, tag = 'scoped memory for tpu_custom_call.1']
    #allocation5 [shape = 'u8[4096]{0}', space=vmem, size = 0x1000, scoped, tag = 'input window, operand 1, single buffered']
    #allocation6 [shape = 's32[1]{0}', space=sflag, size = 0x4, scoped, tag = 'scoped memory for tpu_custom_call.1']
    #allocation7 [shape = 'u8[8192]{0}', space=vmem, size = 0x2000, scoped, tag = 'input window, operand 2, single buffered']
    #allocation8 [shape = 'u8[4096]{0}', space=vmem, size = 0x1000, scoped, tag = 'output window, operand 0, single buffered']
    %8 = vsyncpa [#allocation3], 0
    %9 = vsyncpa [#allocation6], 0
    %10 = vsyncpa [#allocation4], 0
    // Predicated region
    $region2: #{tpu_custom_call.1} parent=1 // pred_check
      _
    $region3: #{tpu_custom_call.1} parent=1 // pred_check_branch
      %12 = sbr.rel (0) target = $region5
    $region4: #{tpu_custom_call.1} parent=1 // pred_region
      %s14 = ssub.s32 128, 128
      %15 = vsyncadd [#allocation3], %s14
      %s17 = sshll.u32 [#allocation2], 4
      %s18 = int_to_ptr.vmem [resolvable:$true] %s17
      %20 = dma.hbm_to_vmem [thread:$0]  %s0, 128, %s18, [#allocation3]
    $region5: #{tpu_custom_call.1} parent=1 // pred_fallthru
      _
    // Predicated region
    $region6: #{tpu_custom_call.1} parent=1 // pred_check
      _
    $region7: #{tpu_custom_call.1} parent=1 // pred_check_branch
      %22 = sbr.rel (0) target = $region9
    $region8: #{tpu_custom_call.1} parent=1 // pred_region
      %s24 = ssub.s32 128, 128
      %25 = vsyncadd [#allocation6], %s24
      %s27 = sshll.u32 [#allocation5], 4
      %s28 = int_to_ptr.vmem [resolvable:$true] %s27
      %30 = dma.hbm_to_vmem [thread:$0]  %s1, 128, %s28, [#allocation6]
    $region9: #{tpu_custom_call.1} parent=1 // pred_fallthru
      _
    // Predicated region
    $region10: #{tpu_custom_call.1} parent=1 // pred_check
      _
    $region11: #{tpu_custom_call.1} parent=1 // pred_check_branch
      %32 = sbr.rel (0) target = $region13
    $region12: #{tpu_custom_call.1} parent=1 // pred_region
      %s34 = ssub.s32 256, 256
      %35 = vsyncadd [#allocation6], %s34
      %s36 = sshll.u32 [#allocation7], 4
      %s37 = int_to_ptr.vmem [resolvable:$true] %s36
      %42 = dma.hbm_to_vmem [thread:$0]  %s2, 256, %s37, [#allocation6], 128, 128, 8
    $region13: #{tpu_custom_call.1} parent=1 // pred_fallthru
      _
    // Predicated region
    $region14: #{tpu_custom_call.1} parent=1 // pred_check
      _
    $region15: #{tpu_custom_call.1} parent=1 // pred_check_branch
      %44 = sbr.rel (0) target = $region17
    $region16: #{tpu_custom_call.1} parent=1 // pred_region
      %45 = dma.done [#allocation3], 128
    $region17: #{tpu_custom_call.1} parent=1 // pred_fallthru
      _
    // Predicated region
    $region18: #{tpu_custom_call.1} parent=1 // pred_check
      _
    $region19: #{tpu_custom_call.1} parent=1 // pred_check_branch
      %47 = sbr.rel (0) target = $region21
    $region20: #{tpu_custom_call.1} parent=1 // pred_region
      %48 = dma.done [#allocation6], 128
    $region21: #{tpu_custom_call.1} parent=1 // pred_fallthru
      _
    // Predicated region
    $region22: #{tpu_custom_call.1} parent=1 // pred_check
      _
    $region23: #{tpu_custom_call.1} parent=1 // pred_check_branch
      %50 = sbr.rel (0) target = $region25
    $region24: #{tpu_custom_call.1} parent=1 // pred_region
      %51 = dma.done [#allocation6], 256
    $region25: #{tpu_custom_call.1} parent=1 // pred_fallthru
      _
    %v52 = vld [vmem:[#allocation2] sm:$0xff]
    %v53 = vld [vmem:[#allocation5] sm:$0xff]
    %v54 = vld [vmem:[#allocation7] sm:$0x1]
    %v55 = vld [vmem:[#allocation7 + $0x1] sm:$0x1]
    %v56 = vld [vmem:[#allocation7 + $0x2] sm:$0x1]
    %v57 = vld [vmem:[#allocation7 + $0x3] sm:$0x1]
    %v58 = vld [vmem:[#allocation7 + $0x4] sm:$0x1]
    %v59 = vld [vmem:[#allocation7 + $0x5] sm:$0x1]
    %v60 = vld [vmem:[#allocation7 + $0x6] sm:$0x1]
    %v61 = vld [vmem:[#allocation7 + $0x7] sm:$0x1]
    %v62 = vld [vmem:[#allocation7 + $0x8] sm:$0x1]
    %v63 = vld [vmem:[#allocation7 + $0x9] sm:$0x1]
    %v64 = vlaneseq
    %v65 = vshrl.u32 %v64, 7
    %v66 = vsub.s32 0, %v65
    %v67 = vrot.slane %v55, %v66
    %v68 = vmul.f32 %v67, %v53
    %v69 = vlaneseq
    %v70 = vshrl.u32 %v69, 7
    %v71 = vsub.s32 0, %v70
    %v72 = vrot.slane %v56, %v71
    %v73 = vadd.f32 %v68, %v72
    %v74 = vxor.u32 %v73, 2147483648
    %v75 = vmul.f32 %v74, 1.442695
    %v76 = vpow.pop %v75
    %v77 = vadd.f32 %v76, 1.0
    %v78 = vrcp.pop %v77
    %v79 = vmul.f32 1.0, %v78
    %v80 = vlaneseq
    %v81 = vshrl.u32 %v80, 7
    %v82 = vsub.s32 0, %v81
    %v83 = vrot.slane %v54, %v82
    %v84 = vmul.f32 %v83, %v79
    %v85 = vlaneseq
    %v86 = vshrl.u32 %v85, 7
    %v87 = vsub.s32 0, %v86
    %v88 = vrot.slane %v57, %v87
    %v89 = vmul.f32 %v88, %v53
    %v90 = vadd.f32 %v84, %v89
    %v91 = vlaneseq
    %v92 = vshrl.u32 %v91, 7
    %v93 = vsub.s32 0, %v92
    %v94 = vrot.slane %v58, %v93
    %v95 = vadd.f32 %v90, %v94
    %v96 = vlaneseq
    %v97 = vshrl.u32 %v96, 7
    %v98 = vsub.s32 0, %v97
    %v99 = vrot.slane %v60, %v98
    %v100 = vmul.f32 %v99, %v53
    %v101 = vlaneseq
    %v102 = vshrl.u32 %v101, 7
    %v103 = vsub.s32 0, %v102
    %v104 = vrot.slane %v61, %v103
    %v105 = vadd.f32 %v100, %v104
    %v106 = vxor.u32 %v105, 2147483648
    %v107 = vmul.f32 %v106, 1.442695
    %v108 = vpow.pop %v107
    %v109 = vadd.f32 %v108, 1.0
    %v110 = vrcp.pop %v109
    %v111 = vmul.f32 1.0, %v110
    %v112 = vlaneseq
    %v113 = vshrl.u32 %v112, 7
    %v114 = vsub.s32 0, %v113
    %v115 = vrot.slane %v59, %v114
    %v116 = vmul.f32 %v115, %v111
    %v117 = vlaneseq
    %v118 = vshrl.u32 %v117, 7
    %v119 = vsub.s32 0, %v118
    %v120 = vrot.slane %v62, %v119
    %v121 = vmul.f32 %v120, %v53
    %v122 = vadd.f32 %v116, %v121
    %v123 = vlaneseq
    %v124 = vshrl.u32 %v123, 7
    %v125 = vsub.s32 0, %v124
    %v126 = vrot.slane %v63, %v125
    %v127 = vadd.f32 %v122, %v126
    %v128 = vsub.f32 %v52, %v95
    %v129 = vmul.f32 %v128, %v127
    %v130 = vadd.f32 %v129, %v95
    %131 = vst [vmem:[#allocation8] sm:$0xff] %v130
    // Predicated region
    $region26: #{tpu_custom_call.1} parent=1 // pred_check
      _
    $region27: #{tpu_custom_call.1} parent=1 // pred_check_branch
      %133 = sbr.rel (0) target = $region29
    $region28: #{tpu_custom_call.1} parent=1 // pred_region
      %s135 = ssub.s32 128, 128
      %136 = vsyncadd [#allocation4], %s135
      %s138 = sshll.u32 [#allocation8], 4
      %s139 = int_to_ptr.vmem [resolvable:$true] %s138
      %141 = dma.vmem_to_hbm [thread:$0]  %s139, 128, %s3, [#allocation4]
    $region29: #{tpu_custom_call.1} parent=1 // pred_fallthru
      _
    // Predicated region
    $region30: #{tpu_custom_call.1} parent=1 // pred_check
      _
    $region31: #{tpu_custom_call.1} parent=1 // pred_check_branch
      %143 = sbr.rel (0) target = $region33
    $region32: #{tpu_custom_call.1} parent=1 // pred_region
      %144 = dma.done [#allocation4], 128
    $region33: #{tpu_custom_call.1} parent=1 // pred_fallthru
      _
    %145 = vsyncpa [#allocation3], 1
    %146 = vsyncpa [#allocation6], 1
    %147 = vsyncpa [#allocation4], 1

</llo_original>
